<compile_context>
chip_gen: v7x
topology: tpu7x:2x2x1
jax: 0.10.0
libtpu: 0.0.40
codegen_flags: <defaults>
</compile_context>

<pallas_src>
import functools

import jax
import jax.numpy as jnp
from jax.experimental import pallas as pl
from jax.experimental.pallas import tpu as pltpu


def _conv_bn_silu_kernel(x_ref, w_ref, shift_ref, o_ref, *, n_taps, rows, row_stride,
                         apply_act):
    """One (Cout-tile, batch, row-tile) block of SiLU(BN(conv(x))).

    x_ref:     (thk*Wo8, K)      im2col'd input slab; tap t starts at row t*Wo8
    w_ref:     (n_taps, K, CO)   BN-scale-folded, K-packed weights for this Cout block
    shift_ref: (1, CO)           folded BN shift (f32)
    o_ref:     (rows, CO)        output slab; rows = row_tile * Wo8 (multiple of 8)
    """
    # First tap initializes the accumulator (no zero-store / no scratch RMW).
    acc = jnp.dot(x_ref[0:rows, :], w_ref[0], preferred_element_type=jnp.float32)
    for t in range(1, n_taps):
        s = t * row_stride                     # static, multiple of 8 (Wo8 % 8 == 0)
        acc = acc + jnp.dot(x_ref[s:s + rows, :], w_ref[t],
                            preferred_element_type=jnp.float32)
    y = acc + shift_ref[...]                   # BN shift (scale folded into weights)
    if apply_act:
        # SiLU = y * sigmoid(y); exp and the approx reciprocal both run on the EUP.
        y = y * pl.reciprocal(1.0 + jnp.exp(-y), approx=True)
    o_ref[...] = y.astype(o_ref.dtype)


def _vmem_capacity_bytes():
    try:
        return int(pltpu.get_tpu_info().vmem_capacity_bytes)
    except Exception:
        return 64 * 1024 * 1024                # conservative (v7x-sized) fallback


def _preferred_co_tile():
    try:
        kind = jax.devices()[0].device_kind.lower()
    except Exception:
        kind = ""
    # v6e / v7x MXUs are 256 wide in N; v2-v5 are 128 wide.
    return 256 if ("v6" in kind or "v7" in kind) else 128


def _vmem_need_bytes(th, halo, wo8, k_dim, n_taps, co_tile, in_bytes, out_bytes):
    """Rough per-grid-step VMEM working set (with BlockSpec double-buffering)."""
    rows = th * wo8
    lin = (th + halo) * wo8
    k_lane = pl.cdiv(k_dim, 128) * 128         # lane padding of K inside VMEM
    k_sub = pl.cdiv(k_dim, 8) * 8
    return (2 * lin * k_lane * in_bytes                 # input block (double-buffered)
            + 2 * n_taps * k_sub * co_tile * in_bytes   # weight block (double-buffered)
            + 2 * rows * co_tile * out_bytes            # output block (double-buffered)
            + rows * co_tile * 4                        # f32 accumulator temporaries
            + 2 * 8 * co_tile * 4)                      # BN shift block


def _pick_row_tile(ho, wo8, k_dim, n_taps, halo, co_tile, in_bytes, out_bytes, budget):
    """Largest output-row tile whose VMEM working set fits the budget."""
    th = max(1, min(ho, 4096 // max(wo8, 1)))  # cap rows per block at ~4K
    while th > 1 and _vmem_need_bytes(th, halo, wo8, k_dim, n_taps, co_tile,
                                      in_bytes, out_bytes) > budget:
        th -= 1
    return th


def conv_bn_silu(x_nchw, weight_oihw, gamma, beta, running_mean, running_var, *,
                 stride=1, padding=None, eps=1e-5, act=True,
                 compute_dtype=jnp.bfloat16, row_tile=None, co_tile=None,
                 pack_kh=None):
    """Matches Conv.forward(x): SiLU(BatchNorm2d_eval(Conv2d(x, bias=False))) on NCHW."""
    assert stride == 1, "TODO(synk): stride > 1 not implemented (module default is 1)"
    n, cin, h, w = x_nchw.shape
    cout, cin_w, kh, kw = weight_oihw.shape
    assert cin_w == cin, "TODO(synk): groups/dilation > 1 not implemented (defaults are 1)"
    if padding is None:
        padding = kh // 2                      # autopad (dilation = 1)

    ho = h + 2 * padding - kh + 1
    wo = w + 2 * padding - kw + 1
    wo8 = pl.cdiv(wo, 8) * 8                   # sublane-dense padded output width

    out_dtype = x_nchw.dtype
    in_bytes = jnp.dtype(compute_dtype).itemsize
    out_bytes = jnp.dtype(out_dtype).itemsize

    # ---- generation-aware sizing --------------------------------------------
    vmem_cap = _vmem_capacity_bytes()
    budget = int(0.7 * vmem_cap)
    if co_tile is None:
        co_tile = 128 if cout <= 128 else _preferred_co_tile()
    cout_p = pl.cdiv(cout, co_tile) * co_tile
    n_co = cout_p // co_tile

    # ---- K-packing mode ------------------------------------------------------
    if pack_kh is None:
        pack_kh = (kw * cin) < 256             # pack all taps while K is MXU-thin
    pack_kh = bool(pack_kh) or kh == 1
    n_taps = 1 if pack_kh else kh
    k_dim = (kh * kw * cin) if pack_kh else (kw * cin)
    halo = 0 if pack_kh else (kh - 1)

    # ---- row tile ------------------------------------------------------------
    if row_tile is None:
        th = _pick_row_tile(ho, wo8, k_dim, n_taps, halo, co_tile,
                            in_bytes, out_bytes, budget)
        th = pl.cdiv(ho, pl.cdiv(ho, th))      # balance tiles (no mostly-pad last tile)
    else:
        th = max(1, min(int(row_tile), ho))
    n_h = pl.cdiv(ho, th)
    ho_pad = n_h * th
    thk = th + halo
    rows = th * wo8                            # output rows per block (multiple of 8)
    lin = thk * wo8                            # input rows per block (multiple of 8)

    # ---- wrapper glue: im2col along W (and along H too when pack_kh) ---------
    x_nhwc = jnp.transpose(x_nchw, (0, 2, 3, 1)).astype(compute_dtype)
    c_idx = jnp.arange(wo)[:, None] + jnp.arange(kw)[None, :]            # (Wo, KW)
    if pack_kh:
        xp = jnp.pad(x_nhwc, ((0, 0), (padding, padding), (padding, padding), (0, 0)))
        r_idx = jnp.arange(ho)[:, None] + jnp.arange(kh)[None, :]        # (Ho, KH)
        patches = xp[:, r_idx[:, :, None, None], c_idx[None, None, :, :], :]
        patches = jnp.transpose(patches, (0, 1, 3, 2, 4, 5))             # (N,Ho,Wo,KH,KW,Cin)
        patches = patches.reshape(n, ho, wo, k_dim)
        patches = jnp.pad(patches, ((0, 0), (0, ho_pad - ho), (0, wo8 - wo), (0, 0)))
        x_win = patches.reshape(n, n_h, lin, k_dim)
    else:
        # TODO(synk): this overlapping-row gather still duplicates the (KH-1)/TH halo
        #             in HBM; a manual-DMA (memory_space=pl.ANY) halo fetch would avoid it.
        xp = jnp.pad(x_nhwc, ((0, 0), (padding, padding + (ho_pad - ho)),
                              (padding, padding), (0, 0)))
        x_col = xp[:, :, c_idx, :].reshape(n, ho_pad + kh - 1, wo, k_dim)
        x_col = jnp.pad(x_col, ((0, 0), (0, 0), (0, wo8 - wo), (0, 0)))
        row_idx = (jnp.arange(n_h) * th)[:, None] + jnp.arange(thk)[None, :]
        x_win = x_col[:, row_idx].reshape(n, n_h, lin, k_dim)

    # ---- fold BN scale into the weights; K-pack to (n_taps, K, Cout_p) -------
    scale = gamma.astype(jnp.float32) / jnp.sqrt(running_var.astype(jnp.float32) + eps)
    shift = beta.astype(jnp.float32) - running_mean.astype(jnp.float32) * scale
    w_hwio = jnp.transpose(weight_oihw, (2, 3, 1, 0)).astype(jnp.float32)  # (KH,KW,Cin,Cout)
    w_fold = (w_hwio * scale[None, None, None, :]).astype(compute_dtype)
    w_fold = jnp.pad(w_fold, ((0, 0), (0, 0), (0, 0), (0, cout_p - cout)))
    w_pack = w_fold.reshape(n_taps, k_dim, cout_p)       # K order (kh,)kw,cin matches x
    shift_p = jnp.pad(shift, (0, cout_p - cout)).reshape(1, cout_p)
    # TODO(synk): optional fp8 (e4m3) weight path for v7x not implemented.

    need = _vmem_need_bytes(th, halo, wo8, k_dim, n_taps, co_tile, in_bytes, out_bytes)
    vmem_limit = int(min(0.9 * vmem_cap,
                         max(32 * 1024 * 1024, int(1.5 * need) + (8 << 20))))

    kernel = functools.partial(_conv_bn_silu_kernel, n_taps=n_taps, rows=rows,
                               row_stride=wo8, apply_act=bool(act))

    out = pl.pallas_call(
        kernel,
        out_shape=jax.ShapeDtypeStruct((n, n_h, rows, cout_p), out_dtype),
        grid_spec=pltpu.PrefetchScalarGridSpec(
            num_scalar_prefetch=0,
            # Cout slowest: weight/shift block index changes only n_co times total,
            # so the folded weights are read from HBM exactly once per Cout block.
            grid=(n_co, n, n_h),
            in_specs=[
                pl.BlockSpec((None, None, lin, k_dim), lambda c, b, r: (b, r, 0, 0)),
                pl.BlockSpec((n_taps, k_dim, co_tile), lambda c, b, r: (0, 0, c)),
                pl.BlockSpec((1, co_tile), lambda c, b, r: (0, c)),
            ],
            out_specs=pl.BlockSpec((None, None, rows, co_tile),
                                   lambda c, b, r: (b, r, 0, c)),
        ),
        compiler_params=pltpu.CompilerParams(
            # No grid axis carries a reduction (taps are folded into K / in-kernel),
            # so all axes can be sharded across cores (v7x megacore).
            dimension_semantics=("parallel", "parallel", "parallel"),
            vmem_limit_bytes=vmem_limit,
        ),
    )(x_win, w_pack, shift_p)

    # (N, nH, TH*Wo8, Cout_p) -> (N, Cout, Ho, Wo); trims Wo8/row/Cout padding.
    out = out.reshape(n, n_h, th, wo8, cout_p)[:, :, :, :wo, :cout]
    out = out.reshape(n, ho_pad, wo, cout)[:, :ho]
    return jnp.transpose(out, (0, 3, 1, 2))


def _reference_matched(x, w_oihw, gamma, beta, mean, var, *, padding, eps, compute_dtype):
    """Same BN-fold + dtype cast as the kernel path (isolates the Pallas impl)."""
    scale = gamma / jnp.sqrt(var + eps)
    shift = beta - mean * scale
    w_fold = (w_oihw * scale[:, None, None, None]).astype(compute_dtype)
    y = jax.lax.conv_general_dilated(
        x.astype(compute_dtype), w_fold, window_strides=(1, 1),
        padding=((padding, padding), (padding, padding)),
        dimension_numbers=("NCHW", "OIHW", "NCHW"),
        preferred_element_type=jnp.float32)
    y = y + shift[None, :, None, None]
    return (y * jax.nn.sigmoid(y)).astype(x.dtype)


def _reference_f32(x, w_oihw, gamma, beta, mean, var, *, padding, eps):
    """Full-precision Conv2d + BatchNorm2d(eval) + SiLU, matching the nn.Module."""
    y = jax.lax.conv_general_dilated(
        x, w_oihw, (1, 1), ((padding, padding), (padding, padding)),
        dimension_numbers=("NCHW", "OIHW", "NCHW"))
    scale = gamma / jnp.sqrt(var + eps)
    shift = beta - mean * scale
    y = y * scale[None, :, None, None] + shift[None, :, None, None]
    return y * jax.nn.sigmoid(y)


if __name__ == "__main__":
    # Conv(input_channels=4, output_channels=8, kernel_size=3) -> autopad = 1
    N, Cin, H, W = 2, 4, 16, 16
    Cout, K = 8, 3

    key = jax.random.PRNGKey(0)
    k_x, k_w, k_g, k_b, k_m, k_v = jax.random.split(key, 6)
    x = jax.random.normal(k_x, (N, Cin, H, W), jnp.float32)
    weight = jax.random.normal(k_w, (Cout, Cin, K, K), jnp.float32) * 0.1
    gamma = 1.0 + 0.1 * jax.random.normal(k_g, (Cout,), jnp.float32)
    beta = 0.1 * jax.random.normal(k_b, (Cout,), jnp.float32)
    running_mean = 0.1 * jax.random.normal(k_m, (Cout,), jnp.float32)
    running_var = 1.0 + 0.1 * jax.random.uniform(k_v, (Cout,), jnp.float32)

    pad = K // 2  # autopad(3) = 1
    eps = 1e-5

    ref_bf16 = _reference_matched(x, weight, gamma, beta, running_mean, running_var,
                                  padding=pad, eps=eps, compute_dtype=jnp.bfloat16)
    ref_f32 = _reference_f32(x, weight, gamma, beta, running_mean, running_var,
                             padding=pad, eps=eps)

    # 1) auto config: full tap packing (Cin*KW < 256), auto row tile, single matmul/block.
    fn_auto = jax.jit(functools.partial(conv_bn_silu, padding=pad))
    out = jax.block_until_ready(
        fn_auto(x, weight, gamma, beta, running_mean, running_var))
    assert out.shape == (N, Cout, H, W), out.shape
    assert jnp.allclose(out, ref_bf16, rtol=2e-2, atol=2e-2), float(
        jnp.max(jnp.abs(out - ref_bf16)))
    assert jnp.allclose(out, ref_f32, rtol=1e-1, atol=1e-1), float(
        jnp.max(jnp.abs(out - ref_f32)))

    # 2) explicit small row tile: exercises the multi-row-tile grid and the ragged
    #    last tile (Ho=16 with row_tile=5).
    fn_tiled = jax.jit(functools.partial(conv_bn_silu, padding=pad, row_tile=5))
    out_t = jax.block_until_ready(
        fn_tiled(x, weight, gamma, beta, running_mean, running_var))
    assert jnp.allclose(out_t, ref_bf16, rtol=2e-2, atol=2e-2), float(
        jnp.max(jnp.abs(out_t - ref_bf16)))

    # 3) KW-only packing: exercises the in-kernel KH row taps (aligned slices) and
    #    the halo-row windows.
    fn_kw = jax.jit(functools.partial(conv_bn_silu, padding=pad, row_tile=5,
                                      pack_kh=False))
    out_k = jax.block_until_ready(
        fn_kw(x, weight, gamma, beta, running_mean, running_var))
    assert jnp.allclose(out_k, ref_bf16, rtol=2e-2, atol=2e-2), float(
        jnp.max(jnp.abs(out_k - ref_bf16)))

    print("KERNEL_OK")
</pallas_src>

<mosaic_0001>
module attributes {stable_mosaic.version = 11 : i64} {
  func.func @_conv_bn_silu_kernel(%arg0: i32, %arg1: i32, %arg2: i32, %arg3: memref<1x1x256x36xbf16, #tpu.memory_space<vmem>>, %arg4: memref<1x36x128xbf16, #tpu.memory_space<vmem>>, %arg5: memref<1x128xf32, #tpu.memory_space<vmem>>, %arg6: memref<1x1x256x128xf32, #tpu.memory_space<vmem>>) attributes {dimension_semantics = [#tpu.dimension_semantics<parallel>, #tpu.dimension_semantics<parallel>, #tpu.dimension_semantics<parallel>], iteration_bounds = array<i64: 1, 2, 1>, scalar_prefetch = 0 : i64, scratch_operands = 0 : i64, tpu.core_type = #tpu.core_type<tc>, window_params = [{transform_indices = @transform_0, window_bounds = array<i64: 1, 1, 256, 36>}, {transform_indices = @transform_1, window_bounds = array<i64: 1, 36, 128>}, {transform_indices = @transform_2, window_bounds = array<i64: 1, 128>}, {transform_indices = @transform_3, window_bounds = array<i64: 1, 1, 256, 128>}]} {
    %c0 = arith.constant 0 : index
    %c0_0 = arith.constant 0 : index
    %c0_1 = arith.constant 0 : index
    %c0_2 = arith.constant 0 : index
    %0 = vector.load %arg3[%c0, %c0_0, %c0_1, %c0_2] : memref<1x1x256x36xbf16, #tpu.memory_space<vmem>>, vector<1x1x256x36xbf16>
    %1 = vector.shape_cast %0 : vector<1x1x256x36xbf16> to vector<256x36xbf16>
    %c0_3 = arith.constant 0 : index
    %c0_4 = arith.constant 0 : index
    %c0_5 = arith.constant 0 : index
    %2 = vector.load %arg4[%c0_3, %c0_4, %c0_5] : memref<1x36x128xbf16, #tpu.memory_space<vmem>>, vector<1x36x128xbf16>
    %3 = vector.shape_cast %2 : vector<1x36x128xbf16> to vector<36x128xbf16>
    %cst = arith.constant dense<0.000000e+00> : vector<256x128xf32>
    %4 = tpu.matmul %1, %3, %cst {dimension_numbers = #tpu.dot_dimension_numbers<[1], [0], [0], [1], [0, 0, 1, 1], [], []>} : vector<256x36xbf16>, vector<36x128xbf16>, vector<256x128xf32> -> vector<256x128xf32>
    %c0_6 = arith.constant 0 : index
    %c0_7 = arith.constant 0 : index
    %5 = vector.load %arg5[%c0_6, %c0_7] : memref<1x128xf32, #tpu.memory_space<vmem>>, vector<1x128xf32>
    %6 = vector.broadcast %5 : vector<1x128xf32> to vector<256x128xf32>
    %7 = arith.addf %4, %6 : vector<256x128xf32>
    %cst_8 = arith.constant 0.000000e+00 : f32
    %8 = vector.broadcast %cst_8 : f32 to vector<256x128xf32>
    %9 = arith.subf %8, %7 : vector<256x128xf32>
    %10 = math.exp %9 : vector<256x128xf32>
    %cst_9 = arith.constant 1.000000e+00 : f32
    %11 = vector.broadcast %cst_9 : f32 to vector<256x128xf32>
    %12 = arith.addf %11, %10 : vector<256x128xf32>
    %13 = tpu.reciprocal %12 {approx = true} : vector<256x128xf32> -> vector<256x128xf32>
    %14 = arith.mulf %7, %13 : vector<256x128xf32>
    %c0_10 = arith.constant 0 : index
    %c0_11 = arith.constant 0 : index
    %c0_12 = arith.constant 0 : index
    %c0_13 = arith.constant 0 : index
    %15 = vector.load %arg6[%c0_10, %c0_11, %c0_12, %c0_13] : memref<1x1x256x128xf32, #tpu.memory_space<vmem>>, vector<1x1x256x128xf32>
    %16 = vector.shape_cast %15 : vector<1x1x256x128xf32> to vector<256x128xf32>
    %17 = vector.shape_cast %14 : vector<256x128xf32> to vector<1x1x256x128xf32>
    tpu.vector_store %arg6[%c0_10, %c0_11, %c0_12, %c0_13], %17 {strides = array<i32>} : memref<1x1x256x128xf32, #tpu.memory_space<vmem>>, vector<1x1x256x128xf32>,
    return
  }
  func.func @transform_0(%arg0: i32, %arg1: i32, %arg2: i32) -> (i32, i32, i32, i32) {
    %c0_i32 = arith.constant 0 : i32
    %c0_i32_0 = arith.constant 0 : i32
    %c0_i32_1 = arith.constant 0 : i32
    return %arg1, %arg2, %c0_i32, %c0_i32_0 : i32, i32, i32, i32
  }
  func.func @transform_1(%arg0: i32, %arg1: i32, %arg2: i32) -> (i32, i32, i32) {
    %c0_i32 = arith.constant 0 : i32
    %c0_i32_0 = arith.constant 0 : i32
    %c0_i32_1 = arith.constant 0 : i32
    return %c0_i32, %c0_i32_0, %arg0 : i32, i32, i32
  }
  func.func @transform_2(%arg0: i32, %arg1: i32, %arg2: i32) -> (i32, i32) {
    %c0_i32 = arith.constant 0 : i32
    %c0_i32_0 = arith.constant 0 : i32
    return %c0_i32, %arg0 : i32, i32
  }
  func.func @transform_3(%arg0: i32, %arg1: i32, %arg2: i32) -> (i32, i32, i32, i32) {
    %c0_i32 = arith.constant 0 : i32
    %c0_i32_0 = arith.constant 0 : i32
    return %arg1, %arg2, %c0_i32, %arg0 : i32, i32, i32, i32
  }
}

</mosaic_0001>

<llo_original>
// kernel: conv_bn_silu.1
$region0: #{conv_bn_silu.1}
  #allocation0 [shape = 'u32[]', space=smem, size = 0x4, offset = 0x4, fixed_abs, tag = 'smem constant byte address 0x4 - core index']
  #allocation1 [shape = 'u32[144,128]{1,0:T(1,128)}', space=vmem, size = 0x12000, scoped, tag = 'internal scratch']
  %s0 = inlined_call_operand.vmem [shape: bf16[2,1,256,36], index: 0, kind: input, shape index: {}]
  %s1 = inlined_call_operand.vmem [shape: bf16[1,36,128], index: 1, kind: input, shape index: {}]
  %s2 = inlined_call_operand.vmem [shape: f32[1,128], index: 2, kind: input, shape index: {}]
  %s3 = inlined_call_operand.vmem [shape: f32[2,1,256,128], index: 3, kind: output, shape index: {}]
  %s4 = sld [smem:[#allocation0]]
  $region45: #{conv_bn_silu.1} parent=0
    _
  %s6 = ssub.s32 1, %s4
  %s7 = scalar_select 0, %s6, %s4
  loop: start=0, step=1, limit=4
  $region2: #{conv_bn_silu.1} parent=0 // loop_pre_header
    _
  $region3: #{conv_bn_silu.1} parent=0 // loop_header
    %s9 = sphi 0, %s13
    %p10 = scmp.ge.s32.totalorder %s9, 4
    %s16 = sphi 0, %s35
    %s17 = sphi 0, %s31
    %s18 = sphi 0, %s27
    %s19 = sphi 0, %s16
    %s20 = sphi 0, %s17
    %s21 = sphi 0, %s18
    %s22 = sphi 0, %s19
    %s23 = sphi 0, %s20
    %s24 = sphi 0, %s21
    %s40 = sphi 0, %s42
    %s43 = sphi 0, %s40
    %s44 = sphi 0, %s43
    %s60 = sphi 0, %s44
    %s66 = sphi 0, %s68
    %s69 = sphi 0, %s66
    %s70 = sphi 0, %s69
    %s86 = sphi 0, %s70
    %s92 = sphi 0, %s94
    %s95 = sphi 0, %s92
    %s96 = sphi 0, %s95
    %s112 = sphi 0, %s96
    %s122 = sphi 0, %s124
    %s125 = sphi 0, %s122
    %s126 = sphi 0, %s125
    %s142 = sphi 0, %s126
  $region4: #{conv_bn_silu.1} parent=0 // loop_header_branch
    %12 = sbr.rel (%p10) target = $region8
  $region5: #{conv_bn_silu.1} parent=0 // loop_body
    %s14 = ssub.s32 %s9, 1
    %s15 = ssub.s32 %s9, 2
    %s25 = sadd.s32 1, %s18
    %p26 = scmp.ge.s32.totalorder %s25, 1
    %s27 = scalar_select %p26, 0, %s25
    %s28 = sadd.s32 1, %s17
    %s29 = scalar_select %p26, %s28, %s17
    %p30 = scmp.ge.s32.totalorder %s29, 2
    %s31 = scalar_select %p30, 0, %s29
    %s32 = sadd.s32 1, %s16
    %s33 = scalar_select %p30, %s32, %s16
    %p34 = scmp.ge.s32.totalorder %s33, 1
    %s35 = scalar_select %p34, 0, %s33
    %s36 = ssub.s32 %s17, %s31
    %s37 = ssub.s32 %s18, %s27
    %s38 = sor.u32 %s36, %s37
    %p39 = scmp.eq.s32.totalorder %s38, 0
    %s41 = sadd.s32 %s40, 1
    %s42 = scalar_select %p39, %s40, %s41
    %p45 = pneg %p39
    %p46 = scmp.eq.s32.totalorder %s9, 1
    %p47 = por %p45, %p46
    %p48 = scmp.ne.s32.totalorder %s40, %s43
    %p49 = scmp.eq.s32.totalorder %s9, 0
    %p50 = por %p48, %p49
    %p51 = scmp.ne.s32.totalorder %s40, %s43
    %p52 = scmp.eq.s32.totalorder %s14, 1
    %p53 = por %p51, %p52
    %p54 = scmp.ne.s32.totalorder %s43, %s44
    %p55 = scmp.eq.s32.totalorder %s14, 0
    %p56 = por %p54, %p55
    %p57 = scmp.ne.s32.totalorder %s43, %s44
    %p58 = scmp.eq.s32.totalorder %s15, 1
    %p59 = por %p57, %p58
    %p61 = scmp.ne.s32.totalorder %s44, %s60
    %p62 = scmp.eq.s32.totalorder %s15, 0
    %p63 = por %p61, %p62
    %s64 = ssub.s32 %s16, %s35
    %p65 = scmp.eq.s32.totalorder %s64, 0
    %s67 = sadd.s32 %s66, 1
    %s68 = scalar_select %p65, %s66, %s67
    %p71 = pneg %p65
    %p72 = scmp.eq.s32.totalorder %s9, 1
    %p73 = por %p71, %p72
    %p74 = scmp.ne.s32.totalorder %s66, %s69
    %p75 = scmp.eq.s32.totalorder %s9, 0
    %p76 = por %p74, %p75
    %p77 = scmp.ne.s32.totalorder %s66, %s69
    %p78 = scmp.eq.s32.totalorder %s14, 1
    %p79 = por %p77, %p78
    %p80 = scmp.ne.s32.totalorder %s69, %s70
    %p81 = scmp.eq.s32.totalorder %s14, 0
    %p82 = por %p80, %p81
    %p83 = scmp.ne.s32.totalorder %s69, %s70
    %p84 = scmp.eq.s32.totalorder %s15, 1
    %p85 = por %p83, %p84
    %p87 = scmp.ne.s32.totalorder %s70, %s86
    %p88 = scmp.eq.s32.totalorder %s15, 0
    %p89 = por %p87, %p88
    %s90 = ssub.s32 %s16, %s35
    %p91 = scmp.eq.s32.totalorder %s90, 0
    %s93 = sadd.s32 %s92, 1
    %s94 = scalar_select %p91, %s92, %s93
    %p97 = pneg %p91
    %p98 = scmp.eq.s32.totalorder %s9, 1
    %p99 = por %p97, %p98
    %p100 = scmp.ne.s32.totalorder %s92, %s95
    %p101 = scmp.eq.s32.totalorder %s9, 0
    %p102 = por %p100, %p101
    %p103 = scmp.ne.s32.totalorder %s92, %s95
    %p104 = scmp.eq.s32.totalorder %s14, 1
    %p105 = por %p103, %p104
    %p106 = scmp.ne.s32.totalorder %s95, %s96
    %p107 = scmp.eq.s32.totalorder %s14, 0
    %p108 = por %p106, %p107
    %p109 = scmp.ne.s32.totalorder %s95, %s96
    %p110 = scmp.eq.s32.totalorder %s15, 1
    %p111 = por %p109, %p110
    %p113 = scmp.ne.s32.totalorder %s96, %s112
    %p114 = scmp.eq.s32.totalorder %s15, 0
    %p115 = por %p113, %p114
    %s116 = ssub.s32 %s17, %s31
    %s117 = ssub.s32 %s18, %s27
    %s118 = sor.u32 %s116, %s117
    %s119 = ssub.s32 %s16, %s35
    %s120 = sor.u32 %s118, %s119
    %p121 = scmp.eq.s32.totalorder %s120, 0
    %s123 = sadd.s32 %s122, 1
    %s124 = scalar_select %p121, %s122, %s123
    %p127 = pneg %p121
    %p128 = scmp.eq.s32.totalorder %s9, 1
    %p129 = por %p127, %p128
    %p130 = scmp.ne.s32.totalorder %s122, %s125
    %p131 = scmp.eq.s32.totalorder %s9, 0
    %p132 = por %p130, %p131
    %p133 = scmp.ne.s32.totalorder %s122, %s125
    %p134 = scmp.eq.s32.totalorder %s14, 1
    %p135 = por %p133, %p134
    %p136 = scmp.ne.s32.totalorder %s125, %s126
    %p137 = scmp.eq.s32.totalorder %s14, 0
    %p138 = por %p136, %p137
    %p139 = scmp.ne.s32.totalorder %s125, %s126
    %p140 = scmp.eq.s32.totalorder %s15, 1
    %p141 = por %p139, %p140
    %p143 = scmp.ne.s32.totalorder %s126, %s142
    %p144 = scmp.eq.s32.totalorder %s15, 0
    %p145 = por %p143, %p144
    %p146 = scmp.le.s32.totalorder 1, %s9
    %p147 = scmp.lt.s32.totalorder %s9, 3
    %p148 = pnand %p146, %p147
    %p149 = pneg %p148
    // Predicated region
    $region9: #{conv_bn_silu.1} parent=5 // pred_check
      _
    $region10: #{conv_bn_silu.1} parent=5 // pred_check_branch
      %151 = sbr.rel (%p148) target = $region12
    $region11: #{conv_bn_silu.1} parent=5 // pred_region
      %s152 = ssub.s32 %s9, 1
      // Predicated region
      $region13: #{conv_bn_silu.1} parent=11 // pred_check
        %p153 = pneg %p82
      $region14: #{conv_bn_silu.1} parent=11 // pred_check_branch
        %155 = sbr.rel (%p153) target = $region16
      $region15: #{conv_bn_silu.1} parent=11 // pred_region
        %p156 = scmp.lt.s32.totalorder %s19, 0
        %s157 = scalar_select %p156, %s19, 0
        %s158 = smul.addr %s157, 4
        %s159 = scalar_lea.vmem %s1, %s158
      $region16: #{conv_bn_silu.1} parent=11 // pred_fallthru
        _
      // Predicated region
      $region17: #{conv_bn_silu.1} parent=11 // pred_check
        %p160 = pneg %p108
      $region18: #{conv_bn_silu.1} parent=11 // pred_check_branch
        %162 = sbr.rel (%p160) target = $region20
      $region19: #{conv_bn_silu.1} parent=11 // pred_region
        %p163 = scmp.lt.s32.totalorder %s19, 0
        %s164 = scalar_select %p163, %s19, 0
        %s165 = scalar_lea.vmem %s2, %s164
      $region20: #{conv_bn_silu.1} parent=11 // pred_fallthru
        _
    $region12: #{conv_bn_silu.1} parent=5 // pred_fallthru
      _
    %p166 = scmp.lt.s32.totalorder %s9, 2
    // Predicated region
    $region21: #{conv_bn_silu.1} parent=5 // pred_check
      %p167 = pneg %p166
    $region22: #{conv_bn_silu.1} parent=5 // pred_check_branch
      %169 = sbr.rel (%p167) target = $region24
    $region23: #{conv_bn_silu.1} parent=5 // pred_region
      // Predicated region
      $region25: #{conv_bn_silu.1} parent=23 // pred_check
        %p170 = pneg %p50
      $region26: #{conv_bn_silu.1} parent=23 // pred_check_branch
        %172 = sbr.rel (%p170) target = $region28
      $region27: #{conv_bn_silu.1} parent=23 // pred_region
        %p173 = scmp.lt.s32.totalorder %s17, 1
        %s174 = scalar_select %p173, %s17, 1
        %p175 = scmp.lt.s32.totalorder %s18, 0
        %s176 = scalar_select %p175, %s18, 0
        %s177 = smul.addr %s176, 32
        %s178 = smul.addr %s174, 32
        %s179 = sadd.s32 %s177, %s178
        %s180 = smul.addr %s179, 4
        %s181 = scalar_lea.vmem %s0, %s180
      $region28: #{conv_bn_silu.1} parent=23 // pred_fallthru
        _
    $region24: #{conv_bn_silu.1} parent=5 // pred_fallthru
      _
    %p182 = scmp.le.s32.totalorder 1, %s9
    %p183 = scmp.lt.s32.totalorder %s9, 3
    %p184 = pnand %p182, %p183
    %p185 = pneg %p184
    // Predicated region
    $region29: #{conv_bn_silu.1} parent=5 // pred_check
      _
    $region30: #{conv_bn_silu.1} parent=5 // pred_check_branch
      %187 = sbr.rel (%p184) target = $region32
    $region31: #{conv_bn_silu.1} parent=5 // pred_region
      %s188 = ssub.s32 %s9, 1
      %p189 = scmp.lt.s32.totalorder %s20, 1
      %s190 = scalar_select %p189, %s20, 1
      %p191 = scmp.lt.s32.totalorder %s21, 0
      %s192 = scalar_select %p191, %s21, 0
      %s193 = smul.addr %s192, 32
      %s194 = smul.addr %s190, 32
      %s195 = sadd.s32 %s193, %s194
      %s196 = smul.addr %s195, 4
      %s197 = scalar_lea.vmem %s0, %s196
      %p198 = pneg %p56
      %p199 = pneg %p53
      %p200 = scmp.lt.s32.totalorder %s19, 0
      %s201 = scalar_select %p200, %s19, 0
      %s202 = smul.addr %s201, 4
      %s203 = scalar_lea.vmem %s1, %s202
      %p204 = pneg %p82
      %p205 = pneg %p79
      %p206 = scmp.lt.s32.totalorder %s19, 0
      %s207 = scalar_select %p206, %s19, 0
      %s208 = scalar_lea.vmem %s2, %s207
      %p209 = pneg %p108
      %p210 = pneg %p105
      %p211 = pneg %p138
      %p212 = pneg %p135
      %p213 = scmp.lt.s32.totalorder %s20, 1
      %s214 = scalar_select %p213, %s20, 1
      %p215 = scmp.lt.s32.totalorder %s21, 0
      %s216 = scalar_select %p215, %s21, 0
      %p217 = scmp.lt.s32.totalorder %s19, 0
      %s218 = scalar_select %p217, %s19, 0
      %s219 = smul.addr %s216, 32
      %s220 = sadd.s32 %s218, %s219
      %s221 = smul.addr %s214, 32
      %s222 = sadd.s32 %s220, %s221
      %s223 = smul.addr %s222, 8
      %s224 = scalar_lea.vmem %s3, %s223
      %p225 = scmp.lt.s32.totalorder %s20, 1
      %s226 = scalar_select %p225, %s20, 1
      %p227 = scmp.lt.s32.totalorder %s21, 0
      %s228 = scalar_select %p227, %s21, 0
      %s229 = smul.addr %s228, 32
      %s230 = smul.addr %s226, 32
      %s231 = sadd.s32 %s229, %s230
      %s232 = smul.addr %s231, 4
      %s233 = scalar_lea.vmem %s0, %s232
      %p234 = scmp.lt.s32.totalorder %s19, 0
      %s235 = scalar_select %p234, %s19, 0
      %s236 = smul.addr %s235, 4
      %s237 = scalar_lea.vmem %s1, %s236
      %p238 = scmp.lt.s32.totalorder %s19, 0
      %s239 = scalar_select %p238, %s19, 0
      %s240 = scalar_lea.vmem %s2, %s239
      %p241 = scmp.lt.s32.totalorder %s20, 1
      %s242 = scalar_select %p241, %s20, 1
      %p243 = scmp.lt.s32.totalorder %s21, 0
      %s244 = scalar_select %p243, %s21, 0
      %p245 = scmp.lt.s32.totalorder %s19, 0
      %s246 = scalar_select %p245, %s19, 0
      %s247 = smul.addr %s244, 32
      %s248 = sadd.s32 %s246, %s247
      %s249 = smul.addr %s242, 32
      %s250 = sadd.s32 %s248, %s249
      %s251 = smul.addr %s250, 8
      %s252 = scalar_lea.vmem %s3, %s251
      %v254 = vld [vmem:[%s233] sm:$0xf]
      %v255 = vld [vmem:[%s233 + $0x4] sm:$0xf]
      %v256 = vld [vmem:[%s233 + $0x8] sm:$0xf]
      %v257 = vld [vmem:[%s233 + $0xc] sm:$0xf]
      %v258 = vld [vmem:[%s233 + $0x10] sm:$0xf]
      %v259 = vld [vmem:[%s233 + $0x14] sm:$0xf]
      %v260 = vld [vmem:[%s233 + $0x18] sm:$0xf]
      %v261 = vld [vmem:[%s233 + $0x1c] sm:$0xf]
      %v262 = vld [vmem:[%s233 + $0x20] sm:$0xf]
      %v263 = vld [vmem:[%s233 + $0x24] sm:$0xf]
      %v264 = vld [vmem:[%s233 + $0x28] sm:$0xf]
      %v265 = vld [vmem:[%s233 + $0x2c] sm:$0xf]
      %v266 = vld [vmem:[%s233 + $0x30] sm:$0xf]
      %v267 = vld [vmem:[%s233 + $0x34] sm:$0xf]
      %v268 = vld [vmem:[%s233 + $0x38] sm:$0xf]
      %v269 = vld [vmem:[%s233 + $0x3c] sm:$0xf]
      %v270 = vld [vmem:[%s233 + $0x40] sm:$0xf]
      %v271 = vld [vmem:[%s233 + $0x44] sm:$0xf]
      %v272 = vld [vmem:[%s233 + $0x48] sm:$0xf]
      %v273 = vld [vmem:[%s233 + $0x4c] sm:$0xf]
      %v274 = vld [vmem:[%s233 + $0x50] sm:$0xf]
      %v275 = vld [vmem:[%s233 + $0x54] sm:$0xf]
      %v276 = vld [vmem:[%s233 + $0x58] sm:$0xf]
      %v277 = vld [vmem:[%s233 + $0x5c] sm:$0xf]
      %v278 = vld [vmem:[%s233 + $0x60] sm:$0xf]
      %v279 = vld [vmem:[%s233 + $0x64] sm:$0xf]
      %v280 = vld [vmem:[%s233 + $0x68] sm:$0xf]
      %v281 = vld [vmem:[%s233 + $0x6c] sm:$0xf]
      %v282 = vld [vmem:[%s233 + $0x70] sm:$0xf]
      %v283 = vld [vmem:[%s233 + $0x74] sm:$0xf]
      %v284 = vld [vmem:[%s233 + $0x78] sm:$0xf]
      %v285 = vld [vmem:[%s233 + $0x7c] sm:$0xf]
      %v286 = vld [vmem:[%s237] sm:$0xf]
      %v287 = vld [vmem:[%s237 + $0x4] sm:$0xf]
      %v288 = vld [vmem:[%s237 + $0x8] sm:$0xf]
      %v289 = vld [vmem:[%s237 + $0xc] sm:$0xf]
      %v290 = vld [vmem:[%s237 + $0x10] sm:$0x3]
      %v291 = vld [vmem:[%s240] sm:$0x1]
      %v293 = vlaneseq
      %v294 = vshrl.u32 %v293, 7
      %v295 = vsub.s32 0, %v294
      %v296 = vrot.slane %v291, %v295
      %v330 = vunpack.c.l.b16 %v254
      %v331 = vunpack.c.l.b16 %v255
      %v332 = vunpack.c.l.b16 %v256
      %v333 = vunpack.c.l.b16 %v257
      %v334 = vunpack.c.l.b16 %v258
      %v335 = vunpack.c.l.b16 %v259
      %v336 = vunpack.c.l.b16 %v260
      %v337 = vunpack.c.l.b16 %v261
      %v338 = vunpack.c.l.b16 %v262
      %v339 = vunpack.c.l.b16 %v263
      %v340 = vunpack.c.l.b16 %v264
      %v341 = vunpack.c.l.b16 %v265
      %v342 = vunpack.c.l.b16 %v266
      %v343 = vunpack.c.l.b16 %v267
      %v344 = vunpack.c.l.b16 %v268
      %v345 = vunpack.c.l.b16 %v269
      %v346 = vunpack.c.l.b16 %v270
      %v347 = vunpack.c.l.b16 %v271
      %v348 = vunpack.c.l.b16 %v272
      %v349 = vunpack.c.l.b16 %v273
      %v350 = vunpack.c.l.b16 %v274
      %v351 = vunpack.c.l.b16 %v275
      %v352 = vunpack.c.l.b16 %v276
      %v353 = vunpack.c.l.b16 %v277
      %v354 = vunpack.c.l.b16 %v278
      %v355 = vunpack.c.l.b16 %v279
      %v356 = vunpack.c.l.b16 %v280
      %v357 = vunpack.c.l.b16 %v281
      %v358 = vunpack.c.l.b16 %v282
      %v359 = vunpack.c.l.b16 %v283
      %v360 = vunpack.c.l.b16 %v284
      %v361 = vunpack.c.l.b16 %v285
      %v362 = vpack.c.b16 %v331, %v330
      %v363 = vpack.c.b16 %v333, %v332
      %v364 = vpack.c.b16 %v335, %v334
      %v365 = vpack.c.b16 %v337, %v336
      %v366 = vpack.c.b16 %v339, %v338
      %v367 = vpack.c.b16 %v341, %v340
      %v368 = vpack.c.b16 %v343, %v342
      %v369 = vpack.c.b16 %v345, %v344
      %v370 = vpack.c.b16 %v347, %v346
      %v371 = vpack.c.b16 %v349, %v348
      %v372 = vpack.c.b16 %v351, %v350
      %v373 = vpack.c.b16 %v353, %v352
      %v374 = vpack.c.b16 %v355, %v354
      %v375 = vpack.c.b16 %v357, %v356
      %v376 = vpack.c.b16 %v359, %v358
      %v377 = vpack.c.b16 %v361, %v360
      %v383 = vunpack.c.l.b16 %v286
      %v384 = vunpack.c.l.b16 %v287
      %v385 = vunpack.c.l.b16 %v288
      %v386 = vunpack.c.l.b16 %v289
      %v387 = vunpack.c.l.b16 %v290
      %v388 = vpack.c.b16 %v384, %v383
      %v389 = vpack.c.b16 %v386, %v385
      %v390 = vpack.c.b16 %v387, %v387
      %vm393 = vcmask 293888
      %v395 = vsel %vm393, %v362, 0
      %v398 = vsel %vm393, %v363, 0
      %v401 = vsel %vm393, %v364, 0
      %v404 = vsel %vm393, %v365, 0
      %v407 = vsel %vm393, %v366, 0
      %v410 = vsel %vm393, %v367, 0
      %v413 = vsel %vm393, %v368, 0
      %v416 = vsel %vm393, %v369, 0
      %v419 = vsel %vm393, %v370, 0
      %v422 = vsel %vm393, %v371, 0
      %v425 = vsel %vm393, %v372, 0
      %v428 = vsel %vm393, %v373, 0
      %v431 = vsel %vm393, %v374, 0
      %v434 = vsel %vm393, %v375, 0
      %v437 = vsel %vm393, %v376, 0
      %v440 = vsel %vm393, %v377, 0
      %vm442 = vcmask 1041408
      %v444 = vsel %vm442, %v390, 0
      %446 = vmatprep.subr.bf16.mxu0 0
      %447 = vmatpush1.bf16.msra.mxu0 %v388
      %448 = vmatprep.subr.bf16.mxu0 0
      %449 = vmatpush1.bf16.msra.mxu0 %v389
      %450 = vmatprep.subr.bf16.mxu0 0
      %451 = vmatpush1.bf16.msra.mxu0 %v444
      %452 = vmatprep.subr.bf16.mxu0 0
      %453 = vmatpush1.bf16.msra.mxu0 0
      %454 = vmatprep.subr.bf16.mxu0 0
      %455 = vmatpush1.bf16.msra.mxu0 0
      %456 = vmatprep.subr.bf16.mxu0 0
      %457 = vmatpush1.bf16.msra.mxu0 0
      %458 = vmatprep.subr.bf16.mxu0 0
      %459 = vmatpush1.bf16.msra.mxu0 0
      %460 = vmatprep.subr.bf16.mxu0 0
      %461 = vmatpush1.bf16.msra.mxu0 0
      %462 = vmatprep.subr.bf16.mxu0 0
      %463 = vmatpush1.bf16.msra.mxu0 0
      %464 = vmatprep.subr.bf16.mxu0 0
      %465 = vmatpush1.bf16.msra.mxu0 0
      %466 = vmatprep.subr.bf16.mxu0 0
      %467 = vmatpush1.bf16.msra.mxu0 0
      %468 = vmatprep.subr.bf16.mxu0 0
      %469 = vmatpush1.bf16.msra.mxu0 0
      %470 = vmatprep.subr.bf16.mxu0 0
      %471 = vmatpush1.bf16.msra.mxu0 0
      %472 = vmatprep.subr.bf16.mxu0 0
      %473 = vmatpush1.bf16.msra.mxu0 0
      %474 = vmatprep.subr.bf16.mxu0 0
      %475 = vmatpush1.bf16.msra.mxu0 0
      %476 = vmatprep.subr.bf16.mxu0 0
      %477 = vmatpush1.bf16.msra.mxu0 0
      %478 = vmatprep.mubr.bf16.mxu0 0
      %479 = vmatmul.mubr.bf16.gmra.mrb[0].mxu0 %v395
      %v480 = vpop.f32.mrb[0].mxu0
      %v481 = vadd.f32 %v296, %v480
      %v482 = vpop.f32.mrb[0].mxu0
      %v483 = vpop.f32.mrb[0].mxu0
      %v484 = vadd.f32 %v296, %v483
      %v485 = vpop.f32.mrb[0].mxu0
      %486 = vmatprep.mubr.bf16.mxu0 0
      %487 = vmatmul.mubr.bf16.gmra.mrb[0].mxu0 %v398
      %v488 = vpop.f32.mrb[0].mxu0
      %v489 = vadd.f32 %v296, %v488
      %v490 = vpop.f32.mrb[0].mxu0
      %v491 = vpop.f32.mrb[0].mxu0
      %v492 = vadd.f32 %v296, %v491
      %v493 = vpop.f32.mrb[0].mxu0
      %494 = vmatprep.mubr.bf16.mxu0 0
      %495 = vmatmul.mubr.bf16.gmra.mrb[0].mxu0 %v401
      %v496 = vpop.f32.mrb[0].mxu0
      %v497 = vadd.f32 %v296, %v496
      %v498 = vpop.f32.mrb[0].mxu0
      %v499 = vpop.f32.mrb[0].mxu0
      %v500 = vadd.f32 %v296, %v499
      %v501 = vpop.f32.mrb[0].mxu0
      %502 = vmatprep.mubr.bf16.mxu0 0
      %503 = vmatmul.mubr.bf16.gmra.mrb[0].mxu0 %v404
      %v504 = vpop.f32.mrb[0].mxu0
      %v505 = vadd.f32 %v296, %v504
      %v506 = vpop.f32.mrb[0].mxu0
      %v507 = vpop.f32.mrb[0].mxu0
      %v508 = vadd.f32 %v296, %v507
      %v509 = vpop.f32.mrb[0].mxu0
      %510 = vmatprep.mubr.bf16.mxu0 0
      %511 = vmatmul.mubr.bf16.gmra.mrb[0].mxu0 %v407
      %v512 = vpop.f32.mrb[0].mxu0
      %v513 = vadd.f32 %v296, %v512
      %v514 = vpop.f32.mrb[0].mxu0
      %v515 = vpop.f32.mrb[0].mxu0
      %v516 = vadd.f32 %v296, %v515
      %v517 = vpop.f32.mrb[0].mxu0
      %518 = vmatprep.mubr.bf16.mxu0 0
      %519 = vmatmul.mubr.bf16.gmra.mrb[0].mxu0 %v410
      %v520 = vpop.f32.mrb[0].mxu0
      %v521 = vadd.f32 %v296, %v520
      %v522 = vpop.f32.mrb[0].mxu0
      %v523 = vpop.f32.mrb[0].mxu0
      %v524 = vadd.f32 %v296, %v523
      %v525 = vpop.f32.mrb[0].mxu0
      %526 = vmatprep.mubr.bf16.mxu0 0
      %527 = vmatmul.mubr.bf16.gmra.mrb[0].mxu0 %v413
      %v528 = vpop.f32.mrb[0].mxu0
      %v529 = vadd.f32 %v296, %v528
      %v530 = vpop.f32.mrb[0].mxu0
      %v531 = vpop.f32.mrb[0].mxu0
      %v532 = vadd.f32 %v296, %v531
      %v533 = vpop.f32.mrb[0].mxu0
      %534 = vmatprep.mubr.bf16.mxu0 0
      %535 = vmatmul.mubr.bf16.gmra.mrb[0].mxu0 %v416
      %v536 = vpop.f32.mrb[0].mxu0
      %v537 = vadd.f32 %v296, %v536
      %v538 = vpop.f32.mrb[0].mxu0
      %v539 = vpop.f32.mrb[0].mxu0
      %v540 = vadd.f32 %v296, %v539
      %v541 = vpop.f32.mrb[0].mxu0
      %542 = vmatprep.mubr.bf16.mxu0 0
      %543 = vmatmul.mubr.bf16.gmra.mrb[0].mxu0 %v419
      %v544 = vpop.f32.mrb[0].mxu0
      %v545 = vadd.f32 %v296, %v544
      %v546 = vpop.f32.mrb[0].mxu0
      %v547 = vpop.f32.mrb[0].mxu0
      %v548 = vadd.f32 %v296, %v547
      %v549 = vpop.f32.mrb[0].mxu0
      %550 = vmatprep.mubr.bf16.mxu0 0
      %551 = vmatmul.mubr.bf16.gmra.mrb[0].mxu0 %v422
      %v552 = vpop.f32.mrb[0].mxu0
      %v553 = vadd.f32 %v296, %v552
      %v554 = vpop.f32.mrb[0].mxu0
      %v555 = vpop.f32.mrb[0].mxu0
      %v556 = vadd.f32 %v296, %v555
      %v557 = vpop.f32.mrb[0].mxu0
      %558 = vmatprep.mubr.bf16.mxu0 0
      %559 = vmatmul.mubr.bf16.gmra.mrb[0].mxu0 %v425
      %v560 = vpop.f32.mrb[0].mxu0
      %v561 = vadd.f32 %v296, %v560
      %v562 = vpop.f32.mrb[0].mxu0
      %v563 = vpop.f32.mrb[0].mxu0
      %v564 = vadd.f32 %v296, %v563
      %v565 = vpop.f32.mrb[0].mxu0
      %566 = vmatprep.mubr.bf16.mxu0 0
      %567 = vmatmul.mubr.bf16.gmra.mrb[0].mxu0 %v428
      %v568 = vpop.f32.mrb[0].mxu0
      %v569 = vadd.f32 %v296, %v568
      %v570 = vpop.f32.mrb[0].mxu0
      %v571 = vpop.f32.mrb[0].mxu0
      %v572 = vadd.f32 %v296, %v571
      %v573 = vpop.f32.mrb[0].mxu0
      %574 = vmatprep.mubr.bf16.mxu0 0
      %575 = vmatmul.mubr.bf16.gmra.mrb[0].mxu0 %v431
      %v576 = vpop.f32.mrb[0].mxu0
      %v577 = vadd.f32 %v296, %v576
      %v578 = vpop.f32.mrb[0].mxu0
      %v579 = vpop.f32.mrb[0].mxu0
      %v580 = vadd.f32 %v296, %v579
      %v581 = vpop.f32.mrb[0].mxu0
      %582 = vmatprep.mubr.bf16.mxu0 0
      %583 = vmatmul.mubr.bf16.gmra.mrb[0].mxu0 %v434
      %v584 = vpop.f32.mrb[0].mxu0
      %v585 = vadd.f32 %v296, %v584
      %v586 = vpop.f32.mrb[0].mxu0
      %v587 = vpop.f32.mrb[0].mxu0
      %v588 = vadd.f32 %v296, %v587
      %v589 = vpop.f32.mrb[0].mxu0
      %590 = vmatprep.mubr.bf16.mxu0 0
      %591 = vmatmul.mubr.bf16.gmra.mrb[0].mxu0 %v437
      %v592 = vpop.f32.mrb[0].mxu0
      %v593 = vadd.f32 %v296, %v592
      %v594 = vpop.f32.mrb[0].mxu0
      %v595 = vpop.f32.mrb[0].mxu0
      %v596 = vadd.f32 %v296, %v595
      %v597 = vpop.f32.mrb[0].mxu0
      %598 = vmatprep.mubr.bf16.mxu0 0
      %599 = vmatmul.mubr.bf16.gmra.mrb[0].mxu0 %v440
      %v600 = vpop.f32.mrb[0].mxu0
      %v601 = vadd.f32 %v296, %v600
      %v602 = vpop.f32.mrb[0].mxu0
      %v603 = vpop.f32.mrb[0].mxu0
      %v604 = vadd.f32 %v296, %v603
      %v605 = vpop.f32.mrb[0].mxu0
      %606 = vdwg.mxu0
      %v607 = vsub.f32 0.0, %v481
      %v608 = vsub.f32 0.0, %v484
      %v609 = vsub.f32 0.0, %v489
      %v610 = vsub.f32 0.0, %v492
      %v611 = vsub.f32 0.0, %v497
      %v612 = vsub.f32 0.0, %v500
      %v613 = vsub.f32 0.0, %v505
      %v614 = vsub.f32 0.0, %v508
      %v615 = vsub.f32 0.0, %v513
      %v616 = vsub.f32 0.0, %v516
      %v617 = vsub.f32 0.0, %v521
      %v618 = vsub.f32 0.0, %v524
      %v619 = vsub.f32 0.0, %v529
      %v620 = vsub.f32 0.0, %v532
      %v621 = vsub.f32 0.0, %v537
      %v622 = vsub.f32 0.0, %v540
      %v623 = vsub.f32 0.0, %v545
      %v624 = vsub.f32 0.0, %v548
      %v625 = vsub.f32 0.0, %v553
      %v626 = vsub.f32 0.0, %v556
      %v627 = vsub.f32 0.0, %v561
      %v628 = vsub.f32 0.0, %v564
      %v629 = vsub.f32 0.0, %v569
      %v630 = vsub.f32 0.0, %v572
      %v631 = vsub.f32 0.0, %v577
      %v632 = vsub.f32 0.0, %v580
      %v633 = vsub.f32 0.0, %v585
      %v634 = vsub.f32 0.0, %v588
      %v635 = vsub.f32 0.0, %v593
      %v636 = vsub.f32 0.0, %v596
      %v637 = vsub.f32 0.0, %v601
      %v638 = vsub.f32 0.0, %v604
      %v639 = vmul.f32 %v607, 1.442695
      %v640 = vpow.pop %v639
      %v641 = vmul.f32 %v608, 1.442695
      %v642 = vpow.pop %v641
      %v643 = vmul.f32 %v609, 1.442695
      %v644 = vpow.pop %v643
      %v645 = vmul.f32 %v610, 1.442695
      %v646 = vpow.pop %v645
      %v647 = vmul.f32 %v611, 1.442695
      %v648 = vpow.pop %v647
      %v649 = vmul.f32 %v612, 1.442695
      %v650 = vpow.pop %v649
      %v651 = vmul.f32 %v613, 1.442695
      %v652 = vpow.pop %v651
      %v653 = vmul.f32 %v614, 1.442695
      %v654 = vpow.pop %v653
      %v655 = vmul.f32 %v615, 1.442695
      %v656 = vpow.pop %v655
      %v657 = vmul.f32 %v616, 1.442695
      %v658 = vpow.pop %v657
      %v659 = vmul.f32 %v617, 1.442695
      %v660 = vpow.pop %v659
      %v661 = vmul.f32 %v618, 1.442695
      %v662 = vpow.pop %v661
      %v663 = vmul.f32 %v619, 1.442695
      %v664 = vpow.pop %v663
      %v665 = vmul.f32 %v620, 1.442695
      %v666 = vpow.pop %v665
      %v667 = vmul.f32 %v621, 1.442695
      %v668 = vpow.pop %v667
      %v669 = vmul.f32 %v622, 1.442695
      %v670 = vpow.pop %v669
      %v671 = vmul.f32 %v623, 1.442695
      %v672 = vpow.pop %v671
      %v673 = vmul.f32 %v624, 1.442695
      %v674 = vpow.pop %v673
      %v675 = vmul.f32 %v625, 1.442695
      %v676 = vpow.pop %v675
      %v677 = vmul.f32 %v626, 1.442695
      %v678 = vpow.pop %v677
      %v679 = vmul.f32 %v627, 1.442695
      %v680 = vpow.pop %v679
      %v681 = vmul.f32 %v628, 1.442695
      %v682 = vpow.pop %v681
      %v683 = vmul.f32 %v629, 1.442695
      %v684 = vpow.pop %v683
      %v685 = vmul.f32 %v630, 1.442695
      %v686 = vpow.pop %v685
      %v687 = vmul.f32 %v631, 1.442695
      %v688 = vpow.pop %v687
      %v689 = vmul.f32 %v632, 1.442695
      %v690 = vpow.pop %v689
      %v691 = vmul.f32 %v633, 1.442695
      %v692 = vpow.pop %v691
      %v693 = vmul.f32 %v634, 1.442695
      %v694 = vpow.pop %v693
      %v695 = vmul.f32 %v635, 1.442695
      %v696 = vpow.pop %v695
      %v697 = vmul.f32 %v636, 1.442695
      %v698 = vpow.pop %v697
      %v699 = vmul.f32 %v637, 1.442695
      %v700 = vpow.pop %v699
      %v701 = vmul.f32 %v638, 1.442695
      %v702 = vpow.pop %v701
      %v703 = vadd.f32 %v640, 1.0
      %v704 = vadd.f32 %v642, 1.0
      %v705 = vadd.f32 %v644, 1.0
      %v706 = vadd.f32 %v646, 1.0
      %v707 = vadd.f32 %v648, 1.0
      %v708 = vadd.f32 %v650, 1.0
      %v709 = vadd.f32 %v652, 1.0
      %v710 = vadd.f32 %v654, 1.0
      %v711 = vadd.f32 %v656, 1.0
      %v712 = vadd.f32 %v658, 1.0
      %v713 = vadd.f32 %v660, 1.0
      %v714 = vadd.f32 %v662, 1.0
      %v715 = vadd.f32 %v664, 1.0
      %v716 = vadd.f32 %v666, 1.0
      %v717 = vadd.f32 %v668, 1.0
      %v718 = vadd.f32 %v670, 1.0
      %v719 = vadd.f32 %v672, 1.0
      %v720 = vadd.f32 %v674, 1.0
      %v721 = vadd.f32 %v676, 1.0
      %v722 = vadd.f32 %v678, 1.0
      %v723 = vadd.f32 %v680, 1.0
      %v724 = vadd.f32 %v682, 1.0
      %v725 = vadd.f32 %v684, 1.0
      %v726 = vadd.f32 %v686, 1.0
      %v727 = vadd.f32 %v688, 1.0
      %v728 = vadd.f32 %v690, 1.0
      %v729 = vadd.f32 %v692, 1.0
      %v730 = vadd.f32 %v694, 1.0
      %v731 = vadd.f32 %v696, 1.0
      %v732 = vadd.f32 %v698, 1.0
      %v733 = vadd.f32 %v700, 1.0
      %v734 = vadd.f32 %v702, 1.0
      %v735 = vrcp.pop %v703
      %v736 = vrcp.pop %v704
      %v737 = vrcp.pop %v705
      %v738 = vrcp.pop %v706
      %v739 = vrcp.pop %v707
      %v740 = vrcp.pop %v708
      %v741 = vrcp.pop %v709
      %v742 = vrcp.pop %v710
      %v743 = vrcp.pop %v711
      %v744 = vrcp.pop %v712
      %v745 = vrcp.pop %v713
      %v746 = vrcp.pop %v714
      %v747 = vrcp.pop %v715
      %v748 = vrcp.pop %v716
      %v749 = vrcp.pop %v717
      %v750 = vrcp.pop %v718
      %v751 = vrcp.pop %v719
      %v752 = vrcp.pop %v720
      %v753 = vrcp.pop %v721
      %v754 = vrcp.pop %v722
      %v755 = vrcp.pop %v723
      %v756 = vrcp.pop %v724
      %v757 = vrcp.pop %v725
      %v758 = vrcp.pop %v726
      %v759 = vrcp.pop %v727
      %v760 = vrcp.pop %v728
      %v761 = vrcp.pop %v729
      %v762 = vrcp.pop %v730
      %v763 = vrcp.pop %v731
      %v764 = vrcp.pop %v732
      %v765 = vrcp.pop %v733
      %v766 = vrcp.pop %v734
      %v767 = vmul.f32 %v481, %v735
      %v768 = vmul.f32 %v484, %v736
      %v769 = vmul.f32 %v489, %v737
      %v770 = vmul.f32 %v492, %v738
      %v771 = vmul.f32 %v497, %v739
      %v772 = vmul.f32 %v500, %v740
      %v773 = vmul.f32 %v505, %v741
      %v774 = vmul.f32 %v508, %v742
      %v775 = vmul.f32 %v513, %v743
      %v776 = vmul.f32 %v516, %v744
      %v777 = vmul.f32 %v521, %v745
      %v778 = vmul.f32 %v524, %v746
      %v779 = vmul.f32 %v529, %v747
      %v780 = vmul.f32 %v532, %v748
      %v781 = vmul.f32 %v537, %v749
      %v782 = vmul.f32 %v540, %v750
      %v783 = vmul.f32 %v545, %v751
      %v784 = vmul.f32 %v548, %v752
      %v785 = vmul.f32 %v553, %v753
      %v786 = vmul.f32 %v556, %v754
      %v787 = vmul.f32 %v561, %v755
      %v788 = vmul.f32 %v564, %v756
      %v789 = vmul.f32 %v569, %v757
      %v790 = vmul.f32 %v572, %v758
      %v791 = vmul.f32 %v577, %v759
      %v792 = vmul.f32 %v580, %v760
      %v793 = vmul.f32 %v585, %v761
      %v794 = vmul.f32 %v588, %v762
      %v795 = vmul.f32 %v593, %v763
      %v796 = vmul.f32 %v596, %v764
      %v797 = vmul.f32 %v601, %v765
      %v798 = vmul.f32 %v604, %v766
      %799 = vst [vmem:[%s252] sm:$0xff] %v767
      %800 = vst [vmem:[%s252 + $0x8] sm:$0xff] %v768
      %801 = vst [vmem:[%s252 + $0x10] sm:$0xff] %v769
      %802 = vst [vmem:[%s252 + $0x18] sm:$0xff] %v770
      %803 = vst [vmem:[%s252 + $0x20] sm:$0xff] %v771
      %804 = vst [vmem:[%s252 + $0x28] sm:$0xff] %v772
      %805 = vst [vmem:[%s252 + $0x30] sm:$0xff] %v773
      %806 = vst [vmem:[%s252 + $0x38] sm:$0xff] %v774
      %807 = vst [vmem:[%s252 + $0x40] sm:$0xff] %v775
      %808 = vst [vmem:[%s252 + $0x48] sm:$0xff] %v776
      %809 = vst [vmem:[%s252 + $0x50] sm:$0xff] %v777
      %810 = vst [vmem:[%s252 + $0x58] sm:$0xff] %v778
      %811 = vst [vmem:[%s252 + $0x60] sm:$0xff] %v779
      %812 = vst [vmem:[%s252 + $0x68] sm:$0xff] %v780
      %813 = vst [vmem:[%s252 + $0x70] sm:$0xff] %v781
      %814 = vst [vmem:[%s252 + $0x78] sm:$0xff] %v782
      %815 = vst [vmem:[%s252 + $0x80] sm:$0xff] %v783
      %816 = vst [vmem:[%s252 + $0x88] sm:$0xff] %v784
      %817 = vst [vmem:[%s252 + $0x90] sm:$0xff] %v785
      %818 = vst [vmem:[%s252 + $0x98] sm:$0xff] %v786
      %819 = vst [vmem:[%s252 + $0xa0] sm:$0xff] %v787
      %820 = vst [vmem:[%s252 + $0xa8] sm:$0xff] %v788
      %821 = vst [vmem:[%s252 + $0xb0] sm:$0xff] %v789
      %822 = vst [vmem:[%s252 + $0xb8] sm:$0xff] %v790
      %823 = vst [vmem:[%s252 + $0xc0] sm:$0xff] %v791
      %824 = vst [vmem:[%s252 + $0xc8] sm:$0xff] %v792
      %825 = vst [vmem:[%s252 + $0xd0] sm:$0xff] %v793
      %826 = vst [vmem:[%s252 + $0xd8] sm:$0xff] %v794
      %827 = vst [vmem:[%s252 + $0xe0] sm:$0xff] %v795
      %828 = vst [vmem:[%s252 + $0xe8] sm:$0xff] %v796
      %829 = vst [vmem:[%s252 + $0xf0] sm:$0xff] %v797
      %830 = vst [vmem:[%s252 + $0xf8] sm:$0xff] %v798
      %p831 = scmp.lt.s32.totalorder %s20, 1
      %s832 = scalar_select %p831, %s20, 1
      %p833 = scmp.lt.s32.totalorder %s21, 0
      %s834 = scalar_select %p833, %s21, 0
      %p835 = scmp.lt.s32.totalorder %s19, 0
      %s836 = scalar_select %p835, %s19, 0
      %s837 = smul.addr %s834, 32
      %s838 = sadd.s32 %s836, %s837
      %s839 = smul.addr %s832, 32
      %s840 = sadd.s32 %s838, %s839
      %s841 = smul.addr %s840, 8
      %s842 = scalar_lea.vmem %s3, %s841
      // Predicated region
      $region33: #{conv_bn_silu.1} parent=31 // pred_check
        %p843 = pneg %p135
      $region34: #{conv_bn_silu.1} parent=31 // pred_check_branch
        %845 = sbr.rel (%p843) target = $region36
      $region35: #{conv_bn_silu.1} parent=31 // pred_region
        _
      $region36: #{conv_bn_silu.1} parent=31 // pred_fallthru
        _
    $region32: #{conv_bn_silu.1} parent=5 // pred_fallthru
      _
    %p846 = scmp.le.s32.totalorder 2, %s9
    // Predicated region
    $region37: #{conv_bn_silu.1} parent=5 // pred_check
      %p847 = pneg %p846
    $region38: #{conv_bn_silu.1} parent=5 // pred_check_branch
      %849 = sbr.rel (%p847) target = $region40
    $region39: #{conv_bn_silu.1} parent=5 // pred_region
      %s850 = ssub.s32 %s9, 2
      // Predicated region
      $region41: #{conv_bn_silu.1} parent=39 // pred_check
        %p851 = pneg %p141
      $region42: #{conv_bn_silu.1} parent=39 // pred_check_branch
        %853 = sbr.rel (%p851) target = $region44
      $region43: #{conv_bn_silu.1} parent=39 // pred_region
        %p854 = scmp.lt.s32.totalorder %s23, 1
        %s855 = scalar_select %p854, %s23, 1
        %p856 = scmp.lt.s32.totalorder %s24, 0
        %s857 = scalar_select %p856, %s24, 0
        %p858 = scmp.lt.s32.totalorder %s22, 0
        %s859 = scalar_select %p858, %s22, 0
        %s860 = smul.addr %s857, 32
        %s861 = sadd.s32 %s859, %s860
        %s862 = smul.addr %s855, 32
        %s863 = sadd.s32 %s861, %s862
        %s864 = smul.addr %s863, 8
        %s865 = scalar_lea.vmem %s3, %s864
      $region44: #{conv_bn_silu.1} parent=39 // pred_fallthru
        _
    $region40: #{conv_bn_silu.1} parent=5 // pred_fallthru
      _
  $region6: #{conv_bn_silu.1} parent=0 // loop_footer
    %s13 = sadd.s32 1, %s9
  $region7: #{conv_bn_silu.1} parent=0 // loop_footer_branch
    %8 = sbr.rel target = $region3
  $region8: #{conv_bn_silu.1} parent=0 // loop_exit
    _

</llo_original>
